<compile_context>
chip_gen: v6e
topology: v6e:2x2x1
jax: 0.10.0
libtpu: 0.0.40
codegen_flags: <defaults>
</compile_context>

<pallas_src>
import functools

import numpy as np
import jax
import jax.numpy as jnp
from jax import lax
from jax.experimental import pallas as pl
from jax.experimental.pallas import tpu as pltpu


def get_frequency_modes(seq_len, modes=64, mode_select_method='random'):
    """Mirror of the PyTorch helper (forward only uses len(index))."""
    modes = min(modes, seq_len // 2)
    if mode_select_method == 'random':
        index = list(range(0, seq_len // 2))
        np.random.shuffle(index)
        index = index[:modes]
    elif mode_select_method == 'higher':
        index = list(range(modes // 4, modes // 4 * 3))
    else:
        index = list(range(0, modes))
    index.sort()
    return index


# --------------------------------------------------------------------------
# Weight construction (host-side, tiny).
# --------------------------------------------------------------------------

def build_lowpass_matrix(L, K):
    """L x L real symmetric matrix == rfft -> keep first K bins -> irfft(n=L)."""
    if K == 0:
        return jnp.zeros((L, L), jnp.float32)
    j = np.arange(K, dtype=np.float64)[:, None]            # (K, 1)
    n = np.arange(L, dtype=np.float64)[None, :]            # (1, L)
    ang = 2.0 * np.pi * j * n / L
    C, S = np.cos(ang), np.sin(ang)
    w = np.where(np.arange(K) == 0, 1.0, 2.0)[:, None]     # DC weight 1, others 2
    M = (C.T @ (w * C) + S.T @ (w * S)) / L                # (L, L), symmetric
    return jnp.asarray(M, dtype=jnp.float32)


def build_lowpass_factors(L, K, r_pad):
    """Rank-2K factorization M = A^T @ S: A = Phi (analysis), S = D*Phi
    (scaled synthesis), both (r_pad, L) bf16 with zero padding rows."""
    j = np.arange(K, dtype=np.float64)[:, None]
    n = np.arange(L, dtype=np.float64)[None, :]
    ang = 2.0 * np.pi * j * n / L
    C, S = np.cos(ang), np.sin(ang)
    w = (np.where(np.arange(K) == 0, 1.0, 2.0) / L)[:, None]
    A = np.zeros((r_pad, L), dtype=np.float64)
    Sw = np.zeros((r_pad, L), dtype=np.float64)
    A[:K], A[K:2 * K] = C, S
    Sw[:K], Sw[K:2 * K] = w * C, w * S
    return (jnp.asarray(A, jnp.bfloat16), jnp.asarray(Sw, jnp.bfloat16))


# --------------------------------------------------------------------------
# Kernels.
# --------------------------------------------------------------------------

def _dense_kernel(x_ref, m_ref, o_ref, *, transpose_out):
    # x_ref: (L, TN) f32 input slab; m_ref: (L, L) bf16 symmetric low-pass matrix.
    # bf16 MXU operands, f32 accumulation; cast in-kernel so the HBM read of x
    # stays a single f32 stream.
    x = x_ref[...].astype(jnp.bfloat16)
    if transpose_out:
        # M symmetric => out^T = x^T @ M: produce the (TN, L) tile directly so
        # the (B,H,E,L) permute is fused into the store (lane-dense along L).
        out = lax.dot_general(x, m_ref[...], (((0,), (0,)), ((), ())),
                              preferred_element_type=jnp.float32)      # (TN, L)
    else:
        out = jnp.dot(m_ref[...], x, preferred_element_type=jnp.float32)  # (L, TN)
    o_ref[...] = out.astype(o_ref.dtype)


def _factored_kernel(x_ref, a_ref, s_ref, o_ref, *, transpose_out):
    # Rank-2K form: out = S^T @ (A @ x) with A = Phi, S = D*Phi, both (R, L) bf16.
    x = x_ref[...].astype(jnp.bfloat16)
    z = jnp.dot(a_ref[...], x, preferred_element_type=jnp.float32)     # (R, TN)
    z = z.astype(jnp.bfloat16)
    if transpose_out:
        out = lax.dot_general(z, s_ref[...], (((0,), (0,)), ((), ())),
                              preferred_element_type=jnp.float32)      # (TN, L)
    else:
        out = lax.dot_general(s_ref[...], z, (((0,), (0,)), ((), ())),
                              preferred_element_type=jnp.float32)      # (L, TN)
    o_ref[...] = out.astype(o_ref.dtype)


# --------------------------------------------------------------------------
# Sizing helpers.
# --------------------------------------------------------------------------

def _vmem_capacity_bytes():
    try:
        return int(pltpu.get_tpu_info().vmem_capacity_bytes)
    except Exception:
        return 64 << 20   # v7x per-core VMEM: a safe lower bound for all gens


def _vmem_needed_bytes(L, TN, itemsize, weight_bytes, factored, R):
    """Honest per-step VMEM estimate: double-buffered I/O blocks, the in-kernel
    bf16 copy of x, the f32 result staging, factored intermediates, resident
    weights, plus compiler-internal scratch headroom."""
    io_blocks = 2 * 2 * L * TN * itemsize        # double-buffered input + output
    x_bf16 = L * TN * 2
    result_f32 = L * TN * 4
    inter = (R * TN * (4 + 2)) if factored else 0   # z in f32 and bf16
    return io_blocks + x_bf16 + result_f32 + inter + weight_bytes + (6 << 20)


def _pick_channel_tile(HEp, L, itemsize, weight_bytes, factored, R, budget):
    """Largest 128-multiple lane tile dividing the (padded) channel dim that
    fits the VMEM budget: big blocks amortize the ~0.35 us/step grid overhead
    (128 MiB parts can take 1024-2048; v7x's 64 MiB budget caps it lower)."""
    for tn in (2048, 1024, 512, 256, 128):
        if HEp % tn:
            continue
        if _vmem_needed_bytes(L, tn, itemsize, weight_bytes, factored, R) <= budget:
            return tn
    return 128


# --------------------------------------------------------------------------
# pallas_call wrapper.
# --------------------------------------------------------------------------

def _launch(x, weights, *, fused, factored, TN, vmem_limit, single_buffer_weights):
    B, L, HEp = x.shape
    grid = (B, HEp // TN)

    def _w_spec(w):
        # Constant index_map: DMA'd once, VMEM-resident. With Buffered(1) the
        # useless second buffer for this constant operand is dropped.
        kwargs = {"pipeline_mode": pl.Buffered(1)} if single_buffer_weights else {}
        return pl.BlockSpec(w.shape, lambda b, c: (0, 0), **kwargs)

    x_spec = pl.BlockSpec((None, L, TN), lambda b, c: (b, 0, c))
    if fused:
        # Transposed output layout (B, HE, L): permute fused into the kernel,
        # lane dim L is a multiple of 128 -> unmasked lane-dense stores.
        out_shape = jax.ShapeDtypeStruct((B, HEp, L), x.dtype)
        out_spec = pl.BlockSpec((None, TN, L), lambda b, c: (b, c, 0))
    else:
        out_shape = jax.ShapeDtypeStruct((B, L, HEp), x.dtype)
        out_spec = pl.BlockSpec((None, L, TN), lambda b, c: (b, 0, c))

    kernel = functools.partial(
        _factored_kernel if factored else _dense_kernel, transpose_out=fused)

    return pl.pallas_call(
        kernel,
        out_shape=out_shape,
        grid_spec=pltpu.PrefetchScalarGridSpec(
            num_scalar_prefetch=0,
            grid=grid,
            in_specs=[x_spec] + [_w_spec(w) for w in weights],
            out_specs=out_spec,
        ),
        compiler_params=pltpu.CompilerParams(
            dimension_semantics=("parallel", "parallel"),   # megacore sharding
            vmem_limit_bytes=vmem_limit,
        ),
    )(x, *weights)


def fourier_block_forward(q, K):
    """q: (B, L, H, E) exactly like the PyTorch module. Returns (B, H, E, L)."""
    B, L, H, E = q.shape
    # Weight-2 rule in M excludes the Nyquist bin; the module guarantees this
    # (modes = min(modes, L//2)).  Guard against a future full-rfft K.
    assert 0 <= K <= L // 2, (K, L)

    HE = H * E
    HEp = ((HE + 127) // 128) * 128              # lane-dense channel dim
    x = q.reshape(B, L, HE)                      # pure reshape, no transpose
    if HEp != HE:
        x = jnp.pad(x, ((0, 0), (0, 0), (0, HEp - HE)))

    # Fuse the output permute only when L gives lane-dense (.., L) stores.
    fused = (L % 128 == 0)

    # Rank-2K factorization for long L (MXU-bound regime on v5e/v7x); dense M
    # for short L where 2K would underfill the MXU / the kernel is HBM-bound.
    r_pad = max(128, ((2 * K + 127) // 128) * 128)
    factored = (K > 0) and (L >= 1024) and (4 * r_pad <= L)
    if factored:
        weights = build_lowpass_factors(L, K, r_pad)             # 2 x (R, L) bf16
    else:
        weights = (build_lowpass_matrix(L, K).astype(jnp.bfloat16),)  # (L, L) bf16

    itemsize = jnp.dtype(q.dtype).itemsize
    # Count weights double-buffered (worst case) so the estimate never lies low.
    wbytes = 2 * sum(int(np.prod(w.shape)) * 2 for w in weights)
    cap = _vmem_capacity_bytes()
    TN = _pick_channel_tile(HEp, L, itemsize, wbytes, factored, r_pad,
                            budget=cap - (8 << 20))
    # v7x has 2 TensorCores: make sure the parallel grid has >= 2 points.
    while B * (HEp // TN) < 2 and TN > 128:
        TN //= 2

    needed = _vmem_needed_bytes(L, TN, itemsize, wbytes, factored, r_pad)
    vmem_limit = int(min(cap, max(needed, 32 << 20)))

    try:
        out = _launch(x, weights, fused=fused, factored=factored, TN=TN,
                      vmem_limit=vmem_limit, single_buffer_weights=True)
    except Exception:
        # Portability guard: if this JAX build rejects
        # BlockSpec(pipeline_mode=pl.Buffered(1)), rerun with default
        # double-buffered weights (identical semantics, slightly more VMEM).
        out = _launch(x, weights, fused=fused, factored=factored, TN=TN,
                      vmem_limit=vmem_limit, single_buffer_weights=False)

    if fused:
        if HEp != HE:
            out = out[:, :HE, :]
        return out.reshape(B, H, E, L)           # free reshape: permute was fused
    if HEp != HE:
        out = out[..., :HE]
    # TODO(synk): for L not a multiple of 128 the final permute stays in XLA
    # (in-kernel transposed stores would be masked); pad L if this path ever
    # becomes the hot one.
    return jnp.transpose(out.reshape(B, L, H, E), (0, 2, 3, 1))


def reference_forward(q, K):
    """Pure-JAX reference reproducing torch.fft.rfft/irfft semantics."""
    x = jnp.transpose(q, (0, 2, 3, 1))
    L = x.shape[-1]
    x_ft = jnp.fft.rfft(x, axis=-1)
    out_ft = jnp.zeros_like(x_ft)
    out_ft = out_ft.at[..., :K].set(x_ft[..., :K])
    return jnp.fft.irfft(out_ft, n=L, axis=-1).astype(q.dtype)


if __name__ == "__main__":
    np.random.seed(0)
    key = jax.random.PRNGKey(0)

    # (a) module-like small shapes: awkward L and H*E (padded) -> standard-layout
    #     dense path;  (b) L % 128 == 0 -> fused transposed-output dense path;
    # (c) long L -> rank-2K factorized fused path + >=2-grid-point split.
    cases = [
        dict(B=2, L=16, H=4, E=8, modes=4),
        dict(B=2, L=128, H=4, E=16, modes=16),
        dict(B=1, L=1024, H=2, E=128, modes=64),
    ]
    for i, c in enumerate(cases):
        B, L, H, E, modes = c["B"], c["L"], c["H"], c["E"], c["modes"]
        index = get_frequency_modes(L, modes=modes, mode_select_method='random')
        K = len(index)

        key, sub = jax.random.split(key)
        q = jax.random.normal(sub, (B, L, H, E), dtype=jnp.float32)

        out = jax.block_until_ready(fourier_block_forward(q, K))
        ref = reference_forward(q, K)

        assert out.shape == (B, H, E, L), (i, out.shape)
        # bf16 MXU operands (f32 accumulation) vs f32 FFT reference.
        np.testing.assert_allclose(np.asarray(out), np.asarray(ref),
                                   atol=5e-2, rtol=5e-2)

    print("KERNEL_OK")
</pallas_src>

<mosaic_0001>
module attributes {stable_mosaic.version = 11 : i64} {
  func.func @_dense_kernel(%arg0: i32, %arg1: i32, %arg2: memref<1x16x128xf32, #tpu.memory_space<vmem>>, %arg3: memref<16x16xbf16, #tpu.memory_space<vmem>>, %arg4: memref<1x16x128xf32, #tpu.memory_space<vmem>>) attributes {dimension_semantics = [#tpu.dimension_semantics<parallel>, #tpu.dimension_semantics<parallel>], iteration_bounds = array<i64: 2, 1>, scalar_prefetch = 0 : i64, scratch_operands = 0 : i64, tpu.core_type = #tpu.core_type<tc>, window_params = [{transform_indices = @transform_0, window_bounds = array<i64: 1, 16, 128>}, {pipeline_mode = #tpu.pipeline_mode<synchronous>, transform_indices = @transform_1, window_bounds = array<i64: 16, 16>}, {transform_indices = @transform_2, window_bounds = array<i64: 1, 16, 128>}]} {
    %c0 = arith.constant 0 : index
    %c0_0 = arith.constant 0 : index
    %c0_1 = arith.constant 0 : index
    %0 = vector.load %arg2[%c0, %c0_0, %c0_1] : memref<1x16x128xf32, #tpu.memory_space<vmem>>, vector<1x16x128xf32>
    %1 = vector.shape_cast %0 : vector<1x16x128xf32> to vector<16x128xf32>
    %2 = arith.truncf %1 : vector<16x128xf32> to vector<16x128xbf16>
    %c0_2 = arith.constant 0 : index
    %c0_3 = arith.constant 0 : index
    %3 = vector.load %arg3[%c0_2, %c0_3] : memref<16x16xbf16, #tpu.memory_space<vmem>>, vector<16x16xbf16>
    %cst = arith.constant dense<0.000000e+00> : vector<16x128xf32>
    %4 = tpu.matmul %3, %2, %cst {dimension_numbers = #tpu.dot_dimension_numbers<[1], [0], [0], [1], [0, 0, 1, 1], [], []>} : vector<16x16xbf16>, vector<16x128xbf16>, vector<16x128xf32> -> vector<16x128xf32>
    %c0_4 = arith.constant 0 : index
    %c0_5 = arith.constant 0 : index
    %c0_6 = arith.constant 0 : index
    %5 = vector.load %arg4[%c0_4, %c0_5, %c0_6] : memref<1x16x128xf32, #tpu.memory_space<vmem>>, vector<1x16x128xf32>
    %6 = vector.shape_cast %5 : vector<1x16x128xf32> to vector<16x128xf32>
    %7 = vector.shape_cast %4 : vector<16x128xf32> to vector<1x16x128xf32>
    tpu.vector_store %arg4[%c0_4, %c0_5, %c0_6], %7 {strides = array<i32>} : memref<1x16x128xf32, #tpu.memory_space<vmem>>, vector<1x16x128xf32>,
    return
  }
  func.func @transform_0(%arg0: i32, %arg1: i32) -> (i32, i32, i32) {
    %c0_i32 = arith.constant 0 : i32
    %c0_i32_0 = arith.constant 0 : i32
    return %arg0, %c0_i32, %arg1 : i32, i32, i32
  }
  func.func @transform_1(%arg0: i32, %arg1: i32) -> (i32, i32) {
    %c0_i32 = arith.constant 0 : i32
    %c0_i32_0 = arith.constant 0 : i32
    %c0_i32_1 = arith.constant 0 : i32
    return %c0_i32, %c0_i32_0 : i32, i32
  }
  func.func @transform_2(%arg0: i32, %arg1: i32) -> (i32, i32, i32) {
    %c0_i32 = arith.constant 0 : i32
    %c0_i32_0 = arith.constant 0 : i32
    return %arg0, %c0_i32, %arg1 : i32, i32, i32
  }
}

module attributes {stable_mosaic.version = 11 : i64} {
  func.func @_dense_kernel(%arg0: i32, %arg1: i32, %arg2: memref<1x16x128xf32, #tpu.memory_space<vmem>>, %arg3: memref<16x16xbf16, #tpu.memory_space<vmem>>, %arg4: memref<1x16x128xf32, #tpu.memory_space<vmem>>) attributes {dimension_semantics = [#tpu.dimension_semantics<parallel>, #tpu.dimension_semantics<parallel>], iteration_bounds = array<i64: 2, 1>, scalar_prefetch = 0 : i64, scratch_operands = 0 : i64, tpu.core_type = #tpu.core_type<tc>, window_params = [{transform_indices = @transform_0, window_bounds = array<i64: 1, 16, 128>}, {pipeline_mode = #tpu.pipeline_mode<synchronous>, transform_indices = @transform_1, window_bounds = array<i64: 16, 16>}, {transform_indices = @transform_2, window_bounds = array<i64: 1, 16, 128>}]} {
    %c0 = arith.constant 0 : index
    %c0_0 = arith.constant 0 : index
    %c0_1 = arith.constant 0 : index
    %0 = vector.load %arg2[%c0, %c0_0, %c0_1] : memref<1x16x128xf32, #tpu.memory_space<vmem>>, vector<1x16x128xf32>
    %1 = vector.shape_cast %0 : vector<1x16x128xf32> to vector<16x128xf32>
    %2 = arith.truncf %1 : vector<16x128xf32> to vector<16x128xbf16>
    %c0_2 = arith.constant 0 : index
    %c0_3 = arith.constant 0 : index
    %3 = vector.load %arg3[%c0_2, %c0_3] : memref<16x16xbf16, #tpu.memory_space<vmem>>, vector<16x16xbf16>
    %cst = arith.constant dense<0.000000e+00> : vector<16x128xf32>
    %4 = tpu.matmul %3, %2, %cst {dimension_numbers = #tpu.dot_dimension_numbers<[1], [0], [0], [1], [0, 0, 1, 1], [], []>} : vector<16x16xbf16>, vector<16x128xbf16>, vector<16x128xf32> -> vector<16x128xf32>
    %c0_4 = arith.constant 0 : index
    %c0_5 = arith.constant 0 : index
    %c0_6 = arith.constant 0 : index
    %5 = vector.load %arg4[%c0_4, %c0_5, %c0_6] : memref<1x16x128xf32, #tpu.memory_space<vmem>>, vector<1x16x128xf32>
    %6 = vector.shape_cast %5 : vector<1x16x128xf32> to vector<16x128xf32>
    %7 = vector.shape_cast %4 : vector<16x128xf32> to vector<1x16x128xf32>
    tpu.vector_store %arg4[%c0_4, %c0_5, %c0_6], %7 {strides = array<i32>} : memref<1x16x128xf32, #tpu.memory_space<vmem>>, vector<1x16x128xf32>,
    return
  }
  func.func @transform_0(%arg0: i32, %arg1: i32) -> (i32, i32, i32) {
    %c0_i32 = arith.constant 0 : i32
    %c0_i32_0 = arith.constant 0 : i32
    return %arg0, %c0_i32, %arg1 : i32, i32, i32
  }
  func.func @transform_1(%arg0: i32, %arg1: i32) -> (i32, i32) {
    %c0_i32 = arith.constant 0 : i32
    %c0_i32_0 = arith.constant 0 : i32
    %c0_i32_1 = arith.constant 0 : i32
    return %c0_i32, %c0_i32_0 : i32, i32
  }
  func.func @transform_2(%arg0: i32, %arg1: i32) -> (i32, i32, i32) {
    %c0_i32 = arith.constant 0 : i32
    %c0_i32_0 = arith.constant 0 : i32
    return %arg0, %c0_i32, %arg1 : i32, i32, i32
  }
}

</mosaic_0001>

<llo_original>
// kernel: tpu_custom_call.1
$region0: #{tpu_custom_call.1}
  #allocation0 [shape = 'u32[]', space=smem, size = 0x4, offset = 0x4, fixed_abs, tag = 'smem constant byte address 0x4 - core index']
  #allocation1 [shape = 'u32[144,128]{1,0:T(1,128)}', space=vmem, size = 0x12000, scoped, tag = 'internal scratch']
  %s0 = inlined_call_operand.hbm [shape: f32[2,16,128], index: 0, kind: input, shape index: {}]
  %s1 = inlined_call_operand.hbm [shape: bf16[16,16], index: 1, kind: input, shape index: {}]
  %s2 = inlined_call_operand.hbm [shape: f32[2,16,128], index: 2, kind: output, shape index: {}]
  %s3 = sld [smem:[#allocation0]]
  $region49: #{tpu_custom_call.1} parent=0
    _
  %s5 = ssub.s32 1, %s3
  %s6 = scalar_select 0, %s5, %s3
  $region1: #{tpu_custom_call.1} parent=0
    #allocation2 [shape = 'u8[16384]{0}', space=vmem, size = 0x4000, scoped, tag = 'input window, operand 0']
    #allocation3 [shape = 's32[2]{0}', space=sflag, size = 0x8, scoped, tag = 'scoped memory for tpu_custom_call.1']
    #allocation4 [shape = 's32[2]{0}', space=sflag, size = 0x8, scoped, tag = 'scoped memory for tpu_custom_call.1']
    #allocation5 [shape = 'u8[4096]{0}', space=vmem, size = 0x1000, scoped, tag = 'input window, operand 1, single buffered']
    #allocation6 [shape = 's32[1]{0}', space=sflag, size = 0x4, scoped, tag = 'scoped memory for tpu_custom_call.1']
    #allocation7 [shape = 'u8[16384]{0}', space=vmem, size = 0x4000, scoped, tag = 'output window, operand 0']
    %7 = vsyncpa [#allocation3], 0
    %s8 = scalar_lea.sflag [#allocation3], 1
    %9 = vsyncpa %s8, 0
    %10 = vsyncpa [#allocation6], 0
    %11 = vsyncpa [#allocation4], 0
    %s12 = scalar_lea.sflag [#allocation4], 1
    %13 = vsyncpa %s12, 0
    loop: start=0, step=1, limit=4
    $region2: #{tpu_custom_call.1} parent=1 // loop_pre_header
      _
    $region3: #{tpu_custom_call.1} parent=1 // loop_header
      %s15 = sphi 0, %s19
      %p16 = scmp.ge.s32.totalorder %s15, 4
      %s22 = sphi 0, %s34
      %s23 = sphi 0, %s30
      %s24 = sphi 0, %s22
      %s25 = sphi 0, %s23
      %s26 = sphi 0, %s24
      %s27 = sphi 0, %s25
      %s39 = sphi 0, %s41
      %s42 = sphi 0, %s39
      %s43 = sphi 0, %s42
      %s59 = sphi 0, %s43
      %s63 = sphi 0, %s63
      %s65 = sphi 0, %s63
      %s66 = sphi 0, %s65
      %s80 = sphi 0, %s66
      %s88 = sphi 0, %s90
      %s91 = sphi 0, %s88
      %s92 = sphi 0, %s91
      %s108 = sphi 0, %s92
    $region4: #{tpu_custom_call.1} parent=1 // loop_header_branch
      %18 = sbr.rel (%p16) target = $region8
    $region5: #{tpu_custom_call.1} parent=1 // loop_body
      %s20 = ssub.s32 %s15, 1
      %s21 = ssub.s32 %s15, 2
      %s28 = sadd.s32 1, %s23
      %p29 = scmp.ge.s32.totalorder %s28, 1
      %s30 = scalar_select %p29, 0, %s28
      %s31 = sadd.s32 1, %s22
      %s32 = scalar_select %p29, %s31, %s22
      %p33 = scmp.ge.s32.totalorder %s32, 2
      %s34 = scalar_select %p33, 0, %s32
      %s35 = ssub.s32 %s22, %s34
      %s36 = ssub.s32 %s23, %s30
      %s37 = sor.u32 %s35, %s36
      %p38 = scmp.eq.s32.totalorder %s37, 0
      %s40 = sadd.s32 %s39, 1
      %s41 = scalar_select %p38, %s39, %s40
      %p44 = pneg %p38
      %p45 = scmp.eq.s32.totalorder %s15, 1
      %p46 = por %p44, %p45
      %p47 = scmp.ne.s32.totalorder %s39, %s42
      %p48 = scmp.eq.s32.totalorder %s15, 0
      %p49 = por %p47, %p48
      %p50 = scmp.ne.s32.totalorder %s39, %s42
      %p51 = scmp.eq.s32.totalorder %s20, 1
      %p52 = por %p50, %p51
      %p53 = scmp.ne.s32.totalorder %s42, %s43
      %p54 = scmp.eq.s32.totalorder %s20, 0
      %p55 = por %p53, %p54
      %p56 = scmp.ne.s32.totalorder %s42, %s43
      %p57 = scmp.eq.s32.totalorder %s21, 1
      %p58 = por %p56, %p57
      %p60 = scmp.ne.s32.totalorder %s43, %s59
      %p61 = scmp.eq.s32.totalorder %s21, 0
      %p62 = por %p60, %p61
      %s64 = sadd.s32 %s63, 1
      %p67 = scmp.eq.s32.totalorder %s15, 1
      %p68 = scmp.ne.s32.totalorder %s63, %s65
      %p69 = scmp.eq.s32.totalorder %s15, 0
      %p70 = por %p68, %p69
      %p71 = scmp.ne.s32.totalorder %s63, %s65
      %p72 = scmp.eq.s32.totalorder %s20, 1
      %p73 = por %p71, %p72
      %p74 = scmp.ne.s32.totalorder %s65, %s66
      %p75 = scmp.eq.s32.totalorder %s20, 0
      %p76 = por %p74, %p75
      %p77 = scmp.ne.s32.totalorder %s65, %s66
      %p78 = scmp.eq.s32.totalorder %s21, 1
      %p79 = por %p77, %p78
      %p81 = scmp.ne.s32.totalorder %s66, %s80
      %p82 = scmp.eq.s32.totalorder %s21, 0
      %p83 = por %p81, %p82
      %s84 = ssub.s32 %s22, %s34
      %s85 = ssub.s32 %s23, %s30
      %s86 = sor.u32 %s84, %s85
      %p87 = scmp.eq.s32.totalorder %s86, 0
      %s89 = sadd.s32 %s88, 1
      %s90 = scalar_select %p87, %s88, %s89
      %p93 = pneg %p87
      %p94 = scmp.eq.s32.totalorder %s15, 1
      %p95 = por %p93, %p94
      %p96 = scmp.ne.s32.totalorder %s88, %s91
      %p97 = scmp.eq.s32.totalorder %s15, 0
      %p98 = por %p96, %p97
      %p99 = scmp.ne.s32.totalorder %s88, %s91
      %p100 = scmp.eq.s32.totalorder %s20, 1
      %p101 = por %p99, %p100
      %p102 = scmp.ne.s32.totalorder %s91, %s92
      %p103 = scmp.eq.s32.totalorder %s20, 0
      %p104 = por %p102, %p103
      %p105 = scmp.ne.s32.totalorder %s91, %s92
      %p106 = scmp.eq.s32.totalorder %s21, 1
      %p107 = por %p105, %p106
      %p109 = scmp.ne.s32.totalorder %s92, %s108
      %p110 = scmp.eq.s32.totalorder %s21, 0
      %p111 = por %p109, %p110
      %p112 = scmp.le.s32.totalorder 1, %s15
      %p113 = scmp.lt.s32.totalorder %s15, 3
      %p114 = pnand %p112, %p113
      %p115 = pneg %p114
      // Predicated region
      $region9: #{tpu_custom_call.1} parent=5 // pred_check
        _
      $region10: #{tpu_custom_call.1} parent=5 // pred_check_branch
        %117 = sbr.rel (%p114) target = $region12
      $region11: #{tpu_custom_call.1} parent=5 // pred_region
        %s118 = ssub.s32 %s15, 1
        // Predicated region
        $region13: #{tpu_custom_call.1} parent=11 // pred_check
          %p119 = pneg %p76
        $region14: #{tpu_custom_call.1} parent=11 // pred_check_branch
          %121 = sbr.rel (%p119) target = $region16
        $region15: #{tpu_custom_call.1} parent=11 // pred_region
          %s123 = ssub.s32 128, 128
          %124 = vsyncadd [#allocation6], %s123
          %s125 = sshll.u32 [#allocation5], 4
          %s126 = int_to_ptr.vmem [resolvable:$true] %s125
          %131 = dma.hbm_to_vmem [thread:$0]  %s1, 128, %s126, [#allocation6], 64, 64, 4
        $region16: #{tpu_custom_call.1} parent=11 // pred_fallthru
          _
      $region12: #{tpu_custom_call.1} parent=5 // pred_fallthru
        _
      %p132 = scmp.lt.s32.totalorder %s15, 2
      // Predicated region
      $region17: #{tpu_custom_call.1} parent=5 // pred_check
        %p133 = pneg %p132
      $region18: #{tpu_custom_call.1} parent=5 // pred_check_branch
        %135 = sbr.rel (%p133) target = $region20
      $region19: #{tpu_custom_call.1} parent=5 // pred_region
        // Predicated region
        $region21: #{tpu_custom_call.1} parent=19 // pred_check
          %p136 = pneg %p49
        $region22: #{tpu_custom_call.1} parent=19 // pred_check_branch
          %138 = sbr.rel (%p136) target = $region24
        $region23: #{tpu_custom_call.1} parent=19 // pred_region
          %s139 = sand.u32 %s39, 1
          %s140 = scalar_lea.sflag [#allocation3], %s139
          %s141 = sand.u32 %s39, 1
          %s142 = smul.addr %s141, 16
          %s143 = scalar_lea.vmem [#allocation2], %s142
          %s145 = ssub.s32 256, 256
          %146 = vsyncadd %s140, %s145
          %s147 = smul.addr %s22, 2
          %s148 = sadd.s32 %s23, %s147
          %s149 = smul.addr %s148, 128
          %s150 = scalar_lea.hbm %s0, %s149
          %s151 = sshll.u32 %s143, 4
          %s152 = int_to_ptr.vmem [resolvable:$true] %s151
          %157 = dma.hbm_to_vmem [thread:$0]  %s150, 256, %s152, %s140, 128, 128, 8
        $region24: #{tpu_custom_call.1} parent=19 // pred_fallthru
          _
      $region20: #{tpu_custom_call.1} parent=5 // pred_fallthru
        _
      %p158 = scmp.le.s32.totalorder 1, %s15
      %p159 = scmp.lt.s32.totalorder %s15, 3
      %p160 = pnand %p158, %p159
      %p161 = pneg %p160
      // Predicated region
      $region25: #{tpu_custom_call.1} parent=5 // pred_check
        _
      $region26: #{tpu_custom_call.1} parent=5 // pred_check_branch
        %163 = sbr.rel (%p160) target = $region28
      $region27: #{tpu_custom_call.1} parent=5 // pred_region
        %s164 = ssub.s32 %s15, 1
        %s165 = sand.u32 %s42, 1
        %s166 = scalar_lea.sflag [#allocation3], %s165
        %s167 = sand.u32 %s42, 1
        %s168 = smul.addr %s167, 16
        %s169 = scalar_lea.vmem [#allocation2], %s168
        // Predicated region
        $region29: #{tpu_custom_call.1} parent=27 // pred_check
          %p170 = pneg %p55
        $region30: #{tpu_custom_call.1} parent=27 // pred_check_branch
          %172 = sbr.rel (%p170) target = $region32
        $region31: #{tpu_custom_call.1} parent=27 // pred_region
          %173 = dma.done %s166, 256
        $region32: #{tpu_custom_call.1} parent=27 // pred_fallthru
          _
        // Predicated region
        $region33: #{tpu_custom_call.1} parent=27 // pred_check
          %p174 = pneg %p76
        $region34: #{tpu_custom_call.1} parent=27 // pred_check_branch
          %176 = sbr.rel (%p174) target = $region36
        $region35: #{tpu_custom_call.1} parent=27 // pred_region
          %177 = dma.done [#allocation6], 128
        $region36: #{tpu_custom_call.1} parent=27 // pred_fallthru
          _
        %s178 = sand.u32 %s42, 1
        %s179 = scalar_lea.sflag [#allocation3], %s178
        %s180 = sand.u32 %s42, 1
        %s181 = smul.addr %s180, 16
        %s182 = scalar_lea.vmem [#allocation2], %s181
        %p183 = pneg %p55
        %p184 = pneg %p52
        %p185 = pneg %p76
        %p186 = pneg %p73
        %p187 = pneg %p104
        %p188 = pneg %p101
        %s189 = sand.u32 %s91, 1
        %s190 = scalar_lea.sflag [#allocation4], %s189
        %s191 = sand.u32 %s91, 1
        %s192 = smul.addr %s191, 16
        %s193 = scalar_lea.vmem [#allocation7], %s192
        %v195 = vld [vmem:[%s169] sm:$0xff]
        %v196 = vld [vmem:[%s169 + $0x8] sm:$0xff]
        %v197 = vpack.c.bf16 %v196, %v195
        %v198 = vld [vmem:[#allocation5] sm:$0xf]
        %v199 = vld [vmem:[#allocation5 + $0x4] sm:$0xf]
        %v202 = vunpack.c.l.b16 %v198
        %v203 = vunpack.c.l.b16 %v199
        %v204 = vpack.c.b16 %v203, %v202
        %vm205 = vcmask 130048
        %v207 = vsel %vm205, %v204, 0
        %209 = vmatprep.subr.bf16.mxu0 0
        %210 = vmatpush1.bf16.msra.mxu0 0
        %211 = vmatprep.subr.bf16.mxu0 0
        %212 = vmatpush1.bf16.msra.mxu0 0
        %213 = vmatprep.subr.bf16.mxu0 0
        %214 = vmatpush1.bf16.msra.mxu0 0
        %215 = vmatprep.subr.bf16.mxu0 0
        %216 = vmatpush1.bf16.msra.mxu0 0
        %217 = vmatprep.subr.bf16.mxu0 0
        %218 = vmatpush1.bf16.msra.mxu0 0
        %219 = vmatprep.subr.bf16.mxu0 0
        %220 = vmatpush1.bf16.msra.mxu0 0
        %221 = vmatprep.subr.bf16.mxu0 0
        %222 = vmatpush1.bf16.msra.mxu0 0
        %223 = vmatprep.subr.bf16.mxu0 0
        %224 = vmatpush1.bf16.msra.mxu0 %v197
        %225 = vmatprep.subr.bf16.mxu0 0
        %226 = vmatpush2.bf16.msra.mxu0 0
        %227 = vmatprep.subr.bf16.mxu0 0
        %228 = vmatpush2.bf16.msra.mxu0 0
        %229 = vmatprep.subr.bf16.mxu0 0
        %230 = vmatpush2.bf16.msra.mxu0 0
        %231 = vmatprep.subr.bf16.mxu0 0
        %232 = vmatpush2.bf16.msra.mxu0 0
        %233 = vmatprep.subr.bf16.mxu0 0
        %234 = vmatpush2.bf16.msra.mxu0 0
        %235 = vmatprep.subr.bf16.mxu0 0
        %236 = vmatpush2.bf16.msra.mxu0 0
        %237 = vmatprep.subr.bf16.mxu0 0
        %238 = vmatpush2.bf16.msra.mxu0 0
        %239 = vmatprep.subr.bf16.mxu0 0
        %240 = vmatpush2.bf16.msra.mxu0 0
        %241 = vmatprep.mubr.bf16.mxu0 0
        %242 = vmatmul.mubr.bf16.gmra.mxu0 %v207
        %v243 = vpop.f32.mrf.mxu0
        %v244 = vadd.f32 0.0, %v243
        %v245 = vpop.f32.mrf.mxu0
        %v246 = vpop.f32.mrf.mxu0
        %v247 = vadd.f32 0.0, %v246
        %v248 = vpop.f32.mrf.mxu0
        %249 = vdwg.mxu0
        %250 = vst [vmem:[%s193] sm:$0xff] %v244
        %251 = vst [vmem:[%s193 + $0x8] sm:$0xff] %v247
        %s252 = sand.u32 %s91, 1
        %s253 = scalar_lea.sflag [#allocation4], %s252
        %s254 = sand.u32 %s91, 1
        %s255 = smul.addr %s254, 16
        %s256 = scalar_lea.vmem [#allocation7], %s255
        // Predicated region
        $region37: #{tpu_custom_call.1} parent=27 // pred_check
          %p257 = pneg %p101
        $region38: #{tpu_custom_call.1} parent=27 // pred_check_branch
          %259 = sbr.rel (%p257) target = $region40
        $region39: #{tpu_custom_call.1} parent=27 // pred_region
          %s261 = ssub.s32 256, 256
          %262 = vsyncadd %s253, %s261
          %s263 = smul.addr %s24, 2
          %s264 = sadd.s32 %s25, %s263
          %s265 = smul.addr %s264, 128
          %s266 = scalar_lea.hbm %s2, %s265
          %s267 = sshll.u32 %s256, 4
          %s268 = int_to_ptr.vmem [resolvable:$true] %s267
          %273 = dma.vmem_to_hbm [thread:$0]  %s268, 256, %s266, %s253, 128, 128, 8
        $region40: #{tpu_custom_call.1} parent=27 // pred_fallthru
          _
      $region28: #{tpu_custom_call.1} parent=5 // pred_fallthru
        _
      %p274 = scmp.le.s32.totalorder 2, %s15
      // Predicated region
      $region41: #{tpu_custom_call.1} parent=5 // pred_check
        %p275 = pneg %p274
      $region42: #{tpu_custom_call.1} parent=5 // pred_check_branch
        %277 = sbr.rel (%p275) target = $region44
      $region43: #{tpu_custom_call.1} parent=5 // pred_region
        %s278 = ssub.s32 %s15, 2
        // Predicated region
        $region45: #{tpu_custom_call.1} parent=43 // pred_check
          %p279 = pneg %p107
        $region46: #{tpu_custom_call.1} parent=43 // pred_check_branch
          %281 = sbr.rel (%p279) target = $region48
        $region47: #{tpu_custom_call.1} parent=43 // pred_region
          %s282 = sand.u32 %s92, 1
          %s283 = scalar_lea.sflag [#allocation4], %s282
          %s284 = sand.u32 %s92, 1
          %s285 = smul.addr %s284, 16
          %s286 = scalar_lea.vmem [#allocation7], %s285
          %287 = dma.done %s283, 256
        $region48: #{tpu_custom_call.1} parent=43 // pred_fallthru
          _
      $region44: #{tpu_custom_call.1} parent=5 // pred_fallthru
        _
    $region6: #{tpu_custom_call.1} parent=1 // loop_footer
      %s19 = sadd.s32 1, %s15
    $region7: #{tpu_custom_call.1} parent=1 // loop_footer_branch
      %14 = sbr.rel target = $region3
    $region8: #{tpu_custom_call.1} parent=1 // loop_exit
      _
    %288 = vsyncpa [#allocation3], 1
    %s289 = scalar_lea.sflag [#allocation3], 1
    %290 = vsyncpa %s289, 1
    %291 = vsyncpa [#allocation6], 1
    %292 = vsyncpa [#allocation4], 1
    %s293 = scalar_lea.sflag [#allocation4], 1
    %294 = vsyncpa %s293, 1

// kernel: tpu_custom_call.1
$region0: #{tpu_custom_call.1}
  #allocation0 [shape = 'u32[]', space=smem, size = 0x4, offset = 0x4, fixed_abs, tag = 'smem constant byte address 0x4 - core index']
  #allocation1 [shape = 'u32[144,128]{1,0:T(1,128)}', space=vmem, size = 0x12000, scoped, tag = 'internal scratch']
  %s0 = inlined_call_operand.hbm [shape: f32[2,16,128], index: 0, kind: input, shape index: {}]
  %s1 = inlined_call_operand.hbm [shape: bf16[16,16], index: 1, kind: input, shape index: {}]
  %s2 = inlined_call_operand.hbm [shape: f32[2,16,128], index: 2, kind: output, shape index: {}]
  %s3 = sld [smem:[#allocation0]]
  $region49: #{tpu_custom_call.1} parent=0
    _
  %s5 = ssub.s32 1, %s3
  %s6 = scalar_select 0, %s5, %s3
  $region1: #{tpu_custom_call.1} parent=0
    #allocation2 [shape = 'u8[16384]{0}', space=vmem, size = 0x4000, scoped, tag = 'input window, operand 0']
    #allocation3 [shape = 's32[2]{0}', space=sflag, size = 0x8, scoped, tag = 'scoped memory for tpu_custom_call.1']
    #allocation4 [shape = 's32[2]{0}', space=sflag, size = 0x8, scoped, tag = 'scoped memory for tpu_custom_call.1']
    #allocation5 [shape = 'u8[4096]{0}', space=vmem, size = 0x1000, scoped, tag = 'input window, operand 1, single buffered']
    #allocation6 [shape = 's32[1]{0}', space=sflag, size = 0x4, scoped, tag = 'scoped memory for tpu_custom_call.1']
    #allocation7 [shape = 'u8[16384]{0}', space=vmem, size = 0x4000, scoped, tag = 'output window, operand 0']
    %7 = vsyncpa [#allocation3], 0
    %s8 = scalar_lea.sflag [#allocation3], 1
    %9 = vsyncpa %s8, 0
    %10 = vsyncpa [#allocation6], 0
    %11 = vsyncpa [#allocation4], 0
    %s12 = scalar_lea.sflag [#allocation4], 1
    %13 = vsyncpa %s12, 0
    loop: start=0, step=1, limit=4
    $region2: #{tpu_custom_call.1} parent=1 // loop_pre_header
      _
    $region3: #{tpu_custom_call.1} parent=1 // loop_header
      %s15 = sphi 0, %s19
      %p16 = scmp.ge.s32.totalorder %s15, 4
      %s22 = sphi 0, %s34
      %s23 = sphi 0, %s30
      %s24 = sphi 0, %s22
      %s25 = sphi 0, %s23
      %s26 = sphi 0, %s24
      %s27 = sphi 0, %s25
      %s39 = sphi 0, %s41
      %s42 = sphi 0, %s39
      %s43 = sphi 0, %s42
      %s59 = sphi 0, %s43
      %s63 = sphi 0, %s63
      %s65 = sphi 0, %s63
      %s66 = sphi 0, %s65
      %s80 = sphi 0, %s66
      %s88 = sphi 0, %s90
      %s91 = sphi 0, %s88
      %s92 = sphi 0, %s91
      %s108 = sphi 0, %s92
    $region4: #{tpu_custom_call.1} parent=1 // loop_header_branch
      %18 = sbr.rel (%p16) target = $region8
    $region5: #{tpu_custom_call.1} parent=1 // loop_body
      %s20 = ssub.s32 %s15, 1
      %s21 = ssub.s32 %s15, 2
      %s28 = sadd.s32 1, %s23
      %p29 = scmp.ge.s32.totalorder %s28, 1
      %s30 = scalar_select %p29, 0, %s28
      %s31 = sadd.s32 1, %s22
      %s32 = scalar_select %p29, %s31, %s22
      %p33 = scmp.ge.s32.totalorder %s32, 2
      %s34 = scalar_select %p33, 0, %s32
      %s35 = ssub.s32 %s22, %s34
      %s36 = ssub.s32 %s23, %s30
      %s37 = sor.u32 %s35, %s36
      %p38 = scmp.eq.s32.totalorder %s37, 0
      %s40 = sadd.s32 %s39, 1
      %s41 = scalar_select %p38, %s39, %s40
      %p44 = pneg %p38
      %p45 = scmp.eq.s32.totalorder %s15, 1
      %p46 = por %p44, %p45
      %p47 = scmp.ne.s32.totalorder %s39, %s42
      %p48 = scmp.eq.s32.totalorder %s15, 0
      %p49 = por %p47, %p48
      %p50 = scmp.ne.s32.totalorder %s39, %s42
      %p51 = scmp.eq.s32.totalorder %s20, 1
      %p52 = por %p50, %p51
      %p53 = scmp.ne.s32.totalorder %s42, %s43
      %p54 = scmp.eq.s32.totalorder %s20, 0
      %p55 = por %p53, %p54
      %p56 = scmp.ne.s32.totalorder %s42, %s43
      %p57 = scmp.eq.s32.totalorder %s21, 1
      %p58 = por %p56, %p57
      %p60 = scmp.ne.s32.totalorder %s43, %s59
      %p61 = scmp.eq.s32.totalorder %s21, 0
      %p62 = por %p60, %p61
      %s64 = sadd.s32 %s63, 1
      %p67 = scmp.eq.s32.totalorder %s15, 1
      %p68 = scmp.ne.s32.totalorder %s63, %s65
      %p69 = scmp.eq.s32.totalorder %s15, 0
      %p70 = por %p68, %p69
      %p71 = scmp.ne.s32.totalorder %s63, %s65
      %p72 = scmp.eq.s32.totalorder %s20, 1
      %p73 = por %p71, %p72
      %p74 = scmp.ne.s32.totalorder %s65, %s66
      %p75 = scmp.eq.s32.totalorder %s20, 0
      %p76 = por %p74, %p75
      %p77 = scmp.ne.s32.totalorder %s65, %s66
      %p78 = scmp.eq.s32.totalorder %s21, 1
      %p79 = por %p77, %p78
      %p81 = scmp.ne.s32.totalorder %s66, %s80
      %p82 = scmp.eq.s32.totalorder %s21, 0
      %p83 = por %p81, %p82
      %s84 = ssub.s32 %s22, %s34
      %s85 = ssub.s32 %s23, %s30
      %s86 = sor.u32 %s84, %s85
      %p87 = scmp.eq.s32.totalorder %s86, 0
      %s89 = sadd.s32 %s88, 1
      %s90 = scalar_select %p87, %s88, %s89
      %p93 = pneg %p87
      %p94 = scmp.eq.s32.totalorder %s15, 1
      %p95 = por %p93, %p94
      %p96 = scmp.ne.s32.totalorder %s88, %s91
      %p97 = scmp.eq.s32.totalorder %s15, 0
      %p98 = por %p96, %p97
      %p99 = scmp.ne.s32.totalorder %s88, %s91
      %p100 = scmp.eq.s32.totalorder %s20, 1
      %p101 = por %p99, %p100
      %p102 = scmp.ne.s32.totalorder %s91, %s92
      %p103 = scmp.eq.s32.totalorder %s20, 0
      %p104 = por %p102, %p103
      %p105 = scmp.ne.s32.totalorder %s91, %s92
      %p106 = scmp.eq.s32.totalorder %s21, 1
      %p107 = por %p105, %p106
      %p109 = scmp.ne.s32.totalorder %s92, %s108
      %p110 = scmp.eq.s32.totalorder %s21, 0
      %p111 = por %p109, %p110
      %p112 = scmp.le.s32.totalorder 1, %s15
      %p113 = scmp.lt.s32.totalorder %s15, 3
      %p114 = pnand %p112, %p113
      %p115 = pneg %p114
      // Predicated region
      $region9: #{tpu_custom_call.1} parent=5 // pred_check
        _
      $region10: #{tpu_custom_call.1} parent=5 // pred_check_branch
        %117 = sbr.rel (%p114) target = $region12
      $region11: #{tpu_custom_call.1} parent=5 // pred_region
        %s118 = ssub.s32 %s15, 1
        // Predicated region
        $region13: #{tpu_custom_call.1} parent=11 // pred_check
          %p119 = pneg %p76
        $region14: #{tpu_custom_call.1} parent=11 // pred_check_branch
          %121 = sbr.rel (%p119) target = $region16
        $region15: #{tpu_custom_call.1} parent=11 // pred_region
          %s123 = ssub.s32 128, 128
          %124 = vsyncadd [#allocation6], %s123
          %s125 = sshll.u32 [#allocation5], 4
          %s126 = int_to_ptr.vmem [resolvable:$true] %s125
          %131 = dma.hbm_to_vmem [thread:$0]  %s1, 128, %s126, [#allocation6], 64, 64, 4
        $region16: #{tpu_custom_call.1} parent=11 // pred_fallthru
          _
      $region12: #{tpu_custom_call.1} parent=5 // pred_fallthru
        _
      %p132 = scmp.lt.s32.totalorder %s15, 2
      // Predicated region
      $region17: #{tpu_custom_call.1} parent=5 // pred_check
        %p133 = pneg %p132
      $region18: #{tpu_custom_call.1} parent=5 // pred_check_branch
        %135 = sbr.rel (%p133) target = $region20
      $region19: #{tpu_custom_call.1} parent=5 // pred_region
        // Predicated region
        $region21: #{tpu_custom_call.1} parent=19 // pred_check
          %p136 = pneg %p49
        $region22: #{tpu_custom_call.1} parent=19 // pred_check_branch
          %138 = sbr.rel (%p136) target = $region24
        $region23: #{tpu_custom_call.1} parent=19 // pred_region
          %s139 = sand.u32 %s39, 1
          %s140 = scalar_lea.sflag [#allocation3], %s139
          %s141 = sand.u32 %s39, 1
          %s142 = smul.addr %s141, 16
          %s143 = scalar_lea.vmem [#allocation2], %s142
          %s145 = ssub.s32 256, 256
          %146 = vsyncadd %s140, %s145
          %s147 = smul.addr %s22, 2
          %s148 = sadd.s32 %s23, %s147
          %s149 = smul.addr %s148, 128
          %s150 = scalar_lea.hbm %s0, %s149
          %s151 = sshll.u32 %s143, 4
          %s152 = int_to_ptr.vmem [resolvable:$true] %s151
          %157 = dma.hbm_to_vmem [thread:$0]  %s150, 256, %s152, %s140, 128, 128, 8
        $region24: #{tpu_custom_call.1} parent=19 // pred_fallthru
          _
      $region20: #{tpu_custom_call.1} parent=5 // pred_fallthru
        _
      %p158 = scmp.le.s32.totalorder 1, %s15
      %p159 = scmp.lt.s32.totalorder %s15, 3
      %p160 = pnand %p158, %p159
      %p161 = pneg %p160
      // Predicated region
      $region25: #{tpu_custom_call.1} parent=5 // pred_check
        _
      $region26: #{tpu_custom_call.1} parent=5 // pred_check_branch
        %163 = sbr.rel (%p160) target = $region28
      $region27: #{tpu_custom_call.1} parent=5 // pred_region
        %s164 = ssub.s32 %s15, 1
        %s165 = sand.u32 %s42, 1
        %s166 = scalar_lea.sflag [#allocation3], %s165
        %s167 = sand.u32 %s42, 1
        %s168 = smul.addr %s167, 16
        %s169 = scalar_lea.vmem [#allocation2], %s168
        // Predicated region
        $region29: #{tpu_custom_call.1} parent=27 // pred_check
          %p170 = pneg %p55
        $region30: #{tpu_custom_call.1} parent=27 // pred_check_branch
          %172 = sbr.rel (%p170) target = $region32
        $region31: #{tpu_custom_call.1} parent=27 // pred_region
          %173 = dma.done %s166, 256
        $region32: #{tpu_custom_call.1} parent=27 // pred_fallthru
          _
        // Predicated region
        $region33: #{tpu_custom_call.1} parent=27 // pred_check
          %p174 = pneg %p76
        $region34: #{tpu_custom_call.1} parent=27 // pred_check_branch
          %176 = sbr.rel (%p174) target = $region36
        $region35: #{tpu_custom_call.1} parent=27 // pred_region
          %177 = dma.done [#allocation6], 128
        $region36: #{tpu_custom_call.1} parent=27 // pred_fallthru
          _
        %s178 = sand.u32 %s42, 1
        %s179 = scalar_lea.sflag [#allocation3], %s178
        %s180 = sand.u32 %s42, 1
        %s181 = smul.addr %s180, 16
        %s182 = scalar_lea.vmem [#allocation2], %s181
        %p183 = pneg %p55
        %p184 = pneg %p52
        %p185 = pneg %p76
        %p186 = pneg %p73
        %p187 = pneg %p104
        %p188 = pneg %p101
        %s189 = sand.u32 %s91, 1
        %s190 = scalar_lea.sflag [#allocation4], %s189
        %s191 = sand.u32 %s91, 1
        %s192 = smul.addr %s191, 16
        %s193 = scalar_lea.vmem [#allocation7], %s192
        %v195 = vld [vmem:[%s169] sm:$0xff]
        %v196 = vld [vmem:[%s169 + $0x8] sm:$0xff]
        %v197 = vpack.c.bf16 %v196, %v195
        %v198 = vld [vmem:[#allocation5] sm:$0xf]
        %v199 = vld [vmem:[#allocation5 + $0x4] sm:$0xf]
        %v202 = vunpack.c.l.b16 %v198
        %v203 = vunpack.c.l.b16 %v199
        %v204 = vpack.c.b16 %v203, %v202
        %vm205 = vcmask 130048
        %v207 = vsel %vm205, %v204, 0
        %209 = vmatprep.subr.bf16.mxu0 0
        %210 = vmatpush1.bf16.msra.mxu0 0
        %211 = vmatprep.subr.bf16.mxu0 0
        %212 = vmatpush1.bf16.msra.mxu0 0
        %213 = vmatprep.subr.bf16.mxu0 0
        %214 = vmatpush1.bf16.msra.mxu0 0
        %215 = vmatprep.subr.bf16.mxu0 0
        %216 = vmatpush1.bf16.msra.mxu0 0
        %217 = vmatprep.subr.bf16.mxu0 0
        %218 = vmatpush1.bf16.msra.mxu0 0
        %219 = vmatprep.subr.bf16.mxu0 0
        %220 = vmatpush1.bf16.msra.mxu0 0
        %221 = vmatprep.subr.bf16.mxu0 0
        %222 = vmatpush1.bf16.msra.mxu0 0
        %223 = vmatprep.subr.bf16.mxu0 0
        %224 = vmatpush1.bf16.msra.mxu0 %v197
        %225 = vmatprep.subr.bf16.mxu0 0
        %226 = vmatpush2.bf16.msra.mxu0 0
        %227 = vmatprep.subr.bf16.mxu0 0
        %228 = vmatpush2.bf16.msra.mxu0 0
        %229 = vmatprep.subr.bf16.mxu0 0
        %230 = vmatpush2.bf16.msra.mxu0 0
        %231 = vmatprep.subr.bf16.mxu0 0
        %232 = vmatpush2.bf16.msra.mxu0 0
        %233 = vmatprep.subr.bf16.mxu0 0
        %234 = vmatpush2.bf16.msra.mxu0 0
        %235 = vmatprep.subr.bf16.mxu0 0
        %236 = vmatpush2.bf16.msra.mxu0 0
        %237 = vmatprep.subr.bf16.mxu0 0
        %238 = vmatpush2.bf16.msra.mxu0 0
        %239 = vmatprep.subr.bf16.mxu0 0
        %240 = vmatpush2.bf16.msra.mxu0 0
        %241 = vmatprep.mubr.bf16.mxu0 0
        %242 = vmatmul.mubr.bf16.gmra.mxu0 %v207
        %v243 = vpop.f32.mrf.mxu0
        %v244 = vadd.f32 0.0, %v243
        %v245 = vpop.f32.mrf.mxu0
        %v246 = vpop.f32.mrf.mxu0
        %v247 = vadd.f32 0.0, %v246
        %v248 = vpop.f32.mrf.mxu0
        %249 = vdwg.mxu0
        %250 = vst [vmem:[%s193] sm:$0xff] %v244
        %251 = vst [vmem:[%s193 + $0x8] sm:$0xff] %v247
        %s252 = sand.u32 %s91, 1
        %s253 = scalar_lea.sflag [#allocation4], %s252
        %s254 = sand.u32 %s91, 1
        %s255 = smul.addr %s254, 16
        %s256 = scalar_lea.vmem [#allocation7], %s255
        // Predicated region
        $region37: #{tpu_custom_call.1} parent=27 // pred_check
          %p257 = pneg %p101
        $region38: #{tpu_custom_call.1} parent=27 // pred_check_branch
          %259 = sbr.rel (%p257) target = $region40
        $region39: #{tpu_custom_call.1} parent=27 // pred_region
          %s261 = ssub.s32 256, 256
          %262 = vsyncadd %s253, %s261
          %s263 = smul.addr %s24, 2
          %s264 = sadd.s32 %s25, %s263
          %s265 = smul.addr %s264, 128
          %s266 = scalar_lea.hbm %s2, %s265
          %s267 = sshll.u32 %s256, 4
          %s268 = int_to_ptr.vmem [resolvable:$true] %s267
          %273 = dma.vmem_to_hbm [thread:$0]  %s268, 256, %s266, %s253, 128, 128, 8
        $region40: #{tpu_custom_call.1} parent=27 // pred_fallthru
          _
      $region28: #{tpu_custom_call.1} parent=5 // pred_fallthru
        _
      %p274 = scmp.le.s32.totalorder 2, %s15
      // Predicated region
      $region41: #{tpu_custom_call.1} parent=5 // pred_check
        %p275 = pneg %p274
      $region42: #{tpu_custom_call.1} parent=5 // pred_check_branch
        %277 = sbr.rel (%p275) target = $region44
      $region43: #{tpu_custom_call.1} parent=5 // pred_region
        %s278 = ssub.s32 %s15, 2
        // Predicated region
        $region45: #{tpu_custom_call.1} parent=43 // pred_check
          %p279 = pneg %p107
        $region46: #{tpu_custom_call.1} parent=43 // pred_check_branch
          %281 = sbr.rel (%p279) target = $region48
        $region47: #{tpu_custom_call.1} parent=43 // pred_region
          %s282 = sand.u32 %s92, 1
          %s283 = scalar_lea.sflag [#allocation4], %s282
          %s284 = sand.u32 %s92, 1
          %s285 = smul.addr %s284, 16
          %s286 = scalar_lea.vmem [#allocation7], %s285
          %287 = dma.done %s283, 256
        $region48: #{tpu_custom_call.1} parent=43 // pred_fallthru
          _
      $region44: #{tpu_custom_call.1} parent=5 // pred_fallthru
        _
    $region6: #{tpu_custom_call.1} parent=1 // loop_footer
      %s19 = sadd.s32 1, %s15
    $region7: #{tpu_custom_call.1} parent=1 // loop_footer_branch
      %14 = sbr.rel target = $region3
    $region8: #{tpu_custom_call.1} parent=1 // loop_exit
      _
    %288 = vsyncpa [#allocation3], 1
    %s289 = scalar_lea.sflag [#allocation3], 1
    %290 = vsyncpa %s289, 1
    %291 = vsyncpa [#allocation6], 1
    %292 = vsyncpa [#allocation4], 1
    %s293 = scalar_lea.sflag [#allocation4], 1
    %294 = vsyncpa %s293, 1

</llo_original>
